<compile_context>
chip_gen: v5e
topology: v5e:2x2
jax: 0.10.0
libtpu: 0.0.40
codegen_flags: <defaults>
</compile_context>

<pallas_src>
import functools

import jax
import jax.numpy as jnp
from jax.experimental import pallas as pl
from jax.experimental.pallas import tpu as pltpu

LANE = 128


def make_actor_kernel(max_action):
    def actor_kernel(x_ref, w1_ref, b1_ref, w2_ref, b2_ref, w3_ref, b3_ref, out_ref):
        # layer 1: relu(x @ W1 + b1)   (bf16 x bf16 -> f32 accumulate on MXU)
        h = jnp.dot(x_ref[...], w1_ref[...], preferred_element_type=jnp.float32)
        h = jnp.maximum(h + b1_ref[...], 0.0)
        # layer 2: relu(h @ W2 + b2)
        h = jnp.dot(h.astype(w2_ref.dtype), w2_ref[...],
                    preferred_element_type=jnp.float32)
        h = jnp.maximum(h + b2_ref[...], 0.0)
        # layer 3: max_action * tanh(h @ W3 + b3)   (W3/b3 lane-padded to 128)
        a = jnp.dot(h.astype(w3_ref.dtype), w3_ref[...],
                    preferred_element_type=jnp.float32)
        out_ref[...] = (max_action * jnp.tanh(a + b3_ref[...])).astype(out_ref.dtype)

    return actor_kernel


@functools.partial(jax.jit, static_argnames=("max_action", "tile_b", "weight_dtype"))
def actor_forward(state, params, max_action, *, tile_b=128, weight_dtype=jnp.bfloat16):
    """state: [B, state_dim] f32. params: dict of W1,b1,W2,b2,W3,b3 (f32)."""
    B, state_dim = state.shape
    hidden = params["W1"].shape[1]
    action_dim = params["W3"].shape[1]

    # Lane-dense output: pad the last matmul's N dim up to a multiple of 128.
    padded_act = max(LANE, ((action_dim + LANE - 1) // LANE) * LANE)
    pad_n = padded_act - action_dim

    # bf16 weights (halve HBM traffic, 2x MXU rate on v6e/v7x); f32 biases.
    w1 = params["W1"].astype(weight_dtype)
    w2 = params["W2"].astype(weight_dtype)
    w3 = jnp.pad(params["W3"], ((0, 0), (0, pad_n))).astype(weight_dtype)
    b1 = params["b1"].astype(jnp.float32)
    b2 = params["b2"].astype(jnp.float32)
    b3 = jnp.pad(params["b3"], ((0, 0), (0, pad_n))).astype(jnp.float32)

    # Batch tiling: shrink tile for tiny batches, pad to a multiple of tile_b.
    tile_b = min(tile_b, max(8, ((B + 7) // 8) * 8))
    b_pad = ((B + tile_b - 1) // tile_b) * tile_b
    x = state.astype(weight_dtype)
    if b_pad != B:
        x = jnp.pad(x, ((0, b_pad - B), (0, 0)))
    grid = (b_pad // tile_b,)

    # Weights/biases use constant index_maps -> loaded into VMEM once and kept
    # resident; only the (tile_b, *) state/out tiles stream per grid step.
    # VMEM footprint at these sizes is ~0.5 MiB -> far under 16/32 MiB scoped
    # defaults on all generations (re-derive if hidden/tile_b are scaled up).
    in_specs = [
        pl.BlockSpec((tile_b, state_dim), lambda i: (i, 0)),
        pl.BlockSpec((state_dim, hidden), lambda i: (0, 0)),
        pl.BlockSpec((1, hidden), lambda i: (0, 0)),
        pl.BlockSpec((hidden, hidden), lambda i: (0, 0)),
        pl.BlockSpec((1, hidden), lambda i: (0, 0)),
        pl.BlockSpec((hidden, padded_act), lambda i: (0, 0)),
        pl.BlockSpec((1, padded_act), lambda i: (0, 0)),
    ]
    out_spec = pl.BlockSpec((tile_b, padded_act), lambda i: (i, 0))

    out_padded = pl.pallas_call(
        make_actor_kernel(float(max_action)),
        out_shape=jax.ShapeDtypeStruct((b_pad, padded_act), jnp.float32),
        grid=grid,
        in_specs=in_specs,
        out_specs=out_spec,
        compiler_params=pltpu.CompilerParams(
            dimension_semantics=("parallel",),  # megacore split on v7x
        ),
    )(x, w1, b1, w2, b2, w3, b3)

    return out_padded[:B, :action_dim]


def init_actor_params(key, state_dim, action_dim, hidden=256):
    """Deterministic init mirroring nn.Linear default (uniform +- 1/sqrt(fan_in))."""
    ks = jax.random.split(key, 6)

    def linear(kw, kb, fan_in, fan_out):
        bound = 1.0 / jnp.sqrt(jnp.float32(fan_in))
        W = jax.random.uniform(kw, (fan_in, fan_out), jnp.float32, -bound, bound)
        b = jax.random.uniform(kb, (1, fan_out), jnp.float32, -bound, bound)
        return W, b

    W1, b1 = linear(ks[0], ks[1], state_dim, hidden)
    W2, b2 = linear(ks[2], ks[3], hidden, hidden)
    W3, b3 = linear(ks[4], ks[5], hidden, action_dim)
    return {"W1": W1, "b1": b1, "W2": W2, "b2": b2, "W3": W3, "b3": b3}


def actor_reference(state, params, max_action, weight_dtype=jnp.bfloat16):
    """Same precision path as the kernel (bf16 matmul inputs, f32 accumulate)."""
    x = state.astype(weight_dtype)
    h = jnp.dot(x, params["W1"].astype(weight_dtype),
                preferred_element_type=jnp.float32) + params["b1"]
    h = jnp.maximum(h, 0.0)
    h = jnp.dot(h.astype(weight_dtype), params["W2"].astype(weight_dtype),
                preferred_element_type=jnp.float32) + params["b2"]
    h = jnp.maximum(h, 0.0)
    a = jnp.dot(h.astype(weight_dtype), params["W3"].astype(weight_dtype),
                preferred_element_type=jnp.float32) + params["b3"]
    return max_action * jnp.tanh(a)


if __name__ == "__main__":
    key = jax.random.PRNGKey(0)
    k_state, k_params = jax.random.split(key)

    batch = 256          # >=128 rows so the MXU M dim is actually filled
    state_dim = 16
    action_dim = 8
    max_action = 2.0

    state = jax.random.normal(k_state, (batch, state_dim), jnp.float32)
    params = init_actor_params(k_params, state_dim, action_dim)

    out = actor_forward(state, params, max_action)
    out = jax.block_until_ready(out)

    ref = actor_reference(state, params, max_action)
    assert out.shape == (batch, action_dim)
    assert jnp.allclose(out, ref, atol=1e-3, rtol=1e-3), "mismatch vs reference"

    print("KERNEL_OK")
</pallas_src>

<mosaic_0001>
module attributes {stable_mosaic.version = 11 : i64} {
  func.func @actor_kernel(%arg0: i32, %arg1: memref<128x16xbf16, #tpu.memory_space<vmem>>, %arg2: memref<16x256xbf16, #tpu.memory_space<vmem>>, %arg3: memref<1x256xf32, #tpu.memory_space<vmem>>, %arg4: memref<256x256xbf16, #tpu.memory_space<vmem>>, %arg5: memref<1x256xf32, #tpu.memory_space<vmem>>, %arg6: memref<256x128xbf16, #tpu.memory_space<vmem>>, %arg7: memref<1x128xf32, #tpu.memory_space<vmem>>, %arg8: memref<128x128xf32, #tpu.memory_space<vmem>>) attributes {dimension_semantics = [#tpu.dimension_semantics<parallel>], iteration_bounds = array<i64: 2>, scalar_prefetch = 0 : i64, scratch_operands = 0 : i64, tpu.core_type = #tpu.core_type<tc>, window_params = [{transform_indices = @transform_0, window_bounds = array<i64: 128, 16>}, {pipeline_mode = #tpu.pipeline_mode<synchronous>, transform_indices = @transform_1, window_bounds = array<i64: 16, 256>}, {pipeline_mode = #tpu.pipeline_mode<synchronous>, transform_indices = @transform_2, window_bounds = array<i64: 1, 256>}, {pipeline_mode = #tpu.pipeline_mode<synchronous>, transform_indices = @transform_3, window_bounds = array<i64: 256, 256>}, {pipeline_mode = #tpu.pipeline_mode<synchronous>, transform_indices = @transform_4, window_bounds = array<i64: 1, 256>}, {pipeline_mode = #tpu.pipeline_mode<synchronous>, transform_indices = @transform_5, window_bounds = array<i64: 256, 128>}, {pipeline_mode = #tpu.pipeline_mode<synchronous>, transform_indices = @transform_6, window_bounds = array<i64: 1, 128>}, {transform_indices = @transform_7, window_bounds = array<i64: 128, 128>}]} {
    %c0 = arith.constant 0 : index
    %c0_0 = arith.constant 0 : index
    %0 = vector.load %arg1[%c0, %c0_0] : memref<128x16xbf16, #tpu.memory_space<vmem>>, vector<128x16xbf16>
    %c0_1 = arith.constant 0 : index
    %c0_2 = arith.constant 0 : index
    %1 = vector.load %arg2[%c0_1, %c0_2] : memref<16x256xbf16, #tpu.memory_space<vmem>>, vector<16x256xbf16>
    %cst = arith.constant dense<0.000000e+00> : vector<128x256xf32>
    %2 = tpu.matmul %0, %1, %cst {dimension_numbers = #tpu.dot_dimension_numbers<[1], [0], [0], [1], [0, 0, 1, 1], [], []>} : vector<128x16xbf16>, vector<16x256xbf16>, vector<128x256xf32> -> vector<128x256xf32>
    %c0_3 = arith.constant 0 : index
    %c0_4 = arith.constant 0 : index
    %3 = vector.load %arg3[%c0_3, %c0_4] : memref<1x256xf32, #tpu.memory_space<vmem>>, vector<1x256xf32>
    %4 = vector.broadcast %3 : vector<1x256xf32> to vector<128x256xf32>
    %5 = arith.addf %2, %4 : vector<128x256xf32>
    %cst_5 = arith.constant 0.000000e+00 : f32
    %6 = vector.broadcast %cst_5 : f32 to vector<128x256xf32>
    %7 = arith.maximumf %5, %6 : vector<128x256xf32>
    %8 = arith.truncf %7 : vector<128x256xf32> to vector<128x256xbf16>
    %c0_6 = arith.constant 0 : index
    %c0_7 = arith.constant 0 : index
    %9 = vector.load %arg4[%c0_6, %c0_7] : memref<256x256xbf16, #tpu.memory_space<vmem>>, vector<256x256xbf16>
    %cst_8 = arith.constant dense<0.000000e+00> : vector<128x256xf32>
    %10 = tpu.matmul %8, %9, %cst_8 {dimension_numbers = #tpu.dot_dimension_numbers<[1], [0], [0], [1], [0, 0, 1, 1], [], []>} : vector<128x256xbf16>, vector<256x256xbf16>, vector<128x256xf32> -> vector<128x256xf32>
    %c0_9 = arith.constant 0 : index
    %c0_10 = arith.constant 0 : index
    %11 = vector.load %arg5[%c0_9, %c0_10] : memref<1x256xf32, #tpu.memory_space<vmem>>, vector<1x256xf32>
    %12 = vector.broadcast %11 : vector<1x256xf32> to vector<128x256xf32>
    %13 = arith.addf %10, %12 : vector<128x256xf32>
    %cst_11 = arith.constant 0.000000e+00 : f32
    %14 = vector.broadcast %cst_11 : f32 to vector<128x256xf32>
    %15 = arith.maximumf %13, %14 : vector<128x256xf32>
    %16 = arith.truncf %15 : vector<128x256xf32> to vector<128x256xbf16>
    %c0_12 = arith.constant 0 : index
    %c0_13 = arith.constant 0 : index
    %17 = vector.load %arg6[%c0_12, %c0_13] : memref<256x128xbf16, #tpu.memory_space<vmem>>, vector<256x128xbf16>
    %cst_14 = arith.constant dense<0.000000e+00> : vector<128x128xf32>
    %18 = tpu.matmul %16, %17, %cst_14 {dimension_numbers = #tpu.dot_dimension_numbers<[1], [0], [0], [1], [0, 0, 1, 1], [], []>} : vector<128x256xbf16>, vector<256x128xbf16>, vector<128x128xf32> -> vector<128x128xf32>
    %c0_15 = arith.constant 0 : index
    %c0_16 = arith.constant 0 : index
    %19 = vector.load %arg7[%c0_15, %c0_16] : memref<1x128xf32, #tpu.memory_space<vmem>>, vector<1x128xf32>
    %20 = vector.broadcast %19 : vector<1x128xf32> to vector<128x128xf32>
    %21 = arith.addf %18, %20 : vector<128x128xf32>
    %22 = math.tanh %21 : vector<128x128xf32>
    %cst_17 = arith.constant 2.000000e+00 : f32
    %23 = vector.broadcast %cst_17 : f32 to vector<128x128xf32>
    %24 = arith.mulf %23, %22 : vector<128x128xf32>
    %c0_18 = arith.constant 0 : index
    %c0_19 = arith.constant 0 : index
    %25 = vector.load %arg8[%c0_18, %c0_19] : memref<128x128xf32, #tpu.memory_space<vmem>>, vector<128x128xf32>
    tpu.vector_store %arg8[%c0_18, %c0_19], %24 {strides = array<i32>} : memref<128x128xf32, #tpu.memory_space<vmem>>, vector<128x128xf32>,
    return
  }
  func.func @transform_0(%arg0: i32) -> (i32, i32) {
    %c0_i32 = arith.constant 0 : i32
    %c0_i32_0 = arith.constant 0 : i32
    return %arg0, %c0_i32 : i32, i32
  }
  func.func @transform_1(%arg0: i32) -> (i32, i32) {
    %c0_i32 = arith.constant 0 : i32
    %c0_i32_0 = arith.constant 0 : i32
    %c0_i32_1 = arith.constant 0 : i32
    return %c0_i32, %c0_i32_0 : i32, i32
  }
  func.func @transform_2(%arg0: i32) -> (i32, i32) {
    %c0_i32 = arith.constant 0 : i32
    %c0_i32_0 = arith.constant 0 : i32
    %c0_i32_1 = arith.constant 0 : i32
    return %c0_i32, %c0_i32_0 : i32, i32
  }
  func.func @transform_3(%arg0: i32) -> (i32, i32) {
    %c0_i32 = arith.constant 0 : i32
    %c0_i32_0 = arith.constant 0 : i32
    %c0_i32_1 = arith.constant 0 : i32
    return %c0_i32, %c0_i32_0 : i32, i32
  }
  func.func @transform_4(%arg0: i32) -> (i32, i32) {
    %c0_i32 = arith.constant 0 : i32
    %c0_i32_0 = arith.constant 0 : i32
    %c0_i32_1 = arith.constant 0 : i32
    return %c0_i32, %c0_i32_0 : i32, i32
  }
  func.func @transform_5(%arg0: i32) -> (i32, i32) {
    %c0_i32 = arith.constant 0 : i32
    %c0_i32_0 = arith.constant 0 : i32
    %c0_i32_1 = arith.constant 0 : i32
    return %c0_i32, %c0_i32_0 : i32, i32
  }
  func.func @transform_6(%arg0: i32) -> (i32, i32) {
    %c0_i32 = arith.constant 0 : i32
    %c0_i32_0 = arith.constant 0 : i32
    %c0_i32_1 = arith.constant 0 : i32
    return %c0_i32, %c0_i32_0 : i32, i32
  }
  func.func @transform_7(%arg0: i32) -> (i32, i32) {
    %c0_i32 = arith.constant 0 : i32
    %c0_i32_0 = arith.constant 0 : i32
    return %arg0, %c0_i32 : i32, i32
  }
}

</mosaic_0001>

<llo_original>
// kernel: actor_forward.1
$region0: #{actor_forward.1}
  #allocation0 [shape = 'u32[]', space=smem, size = 0x4, offset = 0x4, fixed_abs, tag = 'smem constant byte address 0x4 - core index']
  #allocation1 [shape = 'u32[72,128]{1,0:T(1,128)}', space=vmem, size = 0x9000, scoped, tag = 'internal scratch']
  %s0 = inlined_call_operand.vmem [shape: bf16[256,16], index: 0, kind: input, shape index: {}]
  %s1 = inlined_call_operand.vmem [shape: bf16[16,256], index: 1, kind: input, shape index: {}]
  %s2 = inlined_call_operand.vmem [shape: f32[1,256], index: 2, kind: input, shape index: {}]
  %s3 = inlined_call_operand.vmem [shape: bf16[256,256], index: 3, kind: input, shape index: {}]
  %s4 = inlined_call_operand.vmem [shape: f32[1,256], index: 4, kind: input, shape index: {}]
  %s5 = inlined_call_operand.vmem [shape: bf16[256,128], index: 5, kind: input, shape index: {}]
  %s6 = inlined_call_operand.vmem [shape: f32[1,128], index: 6, kind: input, shape index: {}]
  %s7 = inlined_call_operand.vmem [shape: f32[256,128], index: 7, kind: output, shape index: {}]
  %s8 = sld [smem:[#allocation0]]
  $region61: #{actor_forward.1} parent=0
    _
  %s10 = ssub.s32 1, %s8
  %s11 = scalar_select 0, %s10, %s8
  loop: start=0, step=1, limit=4
  $region2: #{actor_forward.1} parent=0 // loop_pre_header
    _
  $region3: #{actor_forward.1} parent=0 // loop_header
    %s13 = sphi 0, %s17
    %p14 = scmp.ge.s32.totalorder %s13, 4
    %s23 = sphi 0, %s25
    %s26 = sphi 0, %s23
    %s27 = sphi 0, %s26
    %s43 = sphi 0, %s27
    %s47 = sphi 0, %s47
    %s49 = sphi 0, %s47
    %s50 = sphi 0, %s49
    %s64 = sphi 0, %s50
    %s68 = sphi 0, %s68
    %s70 = sphi 0, %s68
    %s71 = sphi 0, %s70
    %s85 = sphi 0, %s71
    %s89 = sphi 0, %s89
    %s91 = sphi 0, %s89
    %s92 = sphi 0, %s91
    %s106 = sphi 0, %s92
    %s110 = sphi 0, %s110
    %s112 = sphi 0, %s110
    %s113 = sphi 0, %s112
    %s127 = sphi 0, %s113
    %s131 = sphi 0, %s131
    %s133 = sphi 0, %s131
    %s134 = sphi 0, %s133
    %s148 = sphi 0, %s134
    %s152 = sphi 0, %s152
    %s154 = sphi 0, %s152
    %s155 = sphi 0, %s154
    %s169 = sphi 0, %s155
    %s175 = sphi 0, %s177
    %s178 = sphi 0, %s175
    %s179 = sphi 0, %s178
    %s195 = sphi 0, %s179
  $region4: #{actor_forward.1} parent=0 // loop_header_branch
    %16 = sbr.rel (%p14) target = $region8
  $region5: #{actor_forward.1} parent=0 // loop_body
    %s18 = ssub.s32 %s13, 1
    %s19 = ssub.s32 %s13, 2
    %s20 = sadd.s32 %s13, 1
    %s21 = ssub.s32 %s13, %s20
    %p22 = scmp.eq.s32.totalorder %s21, 0
    %s24 = sadd.s32 %s23, 1
    %s25 = scalar_select %p22, %s23, %s24
    %p28 = pneg %p22
    %p29 = scmp.eq.s32.totalorder %s13, 1
    %p30 = por %p28, %p29
    %p31 = scmp.ne.s32.totalorder %s23, %s26
    %p32 = scmp.eq.s32.totalorder %s13, 0
    %p33 = por %p31, %p32
    %p34 = scmp.ne.s32.totalorder %s23, %s26
    %p35 = scmp.eq.s32.totalorder %s18, 1
    %p36 = por %p34, %p35
    %p37 = scmp.ne.s32.totalorder %s26, %s27
    %p38 = scmp.eq.s32.totalorder %s18, 0
    %p39 = por %p37, %p38
    %p40 = scmp.ne.s32.totalorder %s26, %s27
    %p41 = scmp.eq.s32.totalorder %s19, 1
    %p42 = por %p40, %p41
    %p44 = scmp.ne.s32.totalorder %s27, %s43
    %p45 = scmp.eq.s32.totalorder %s19, 0
    %p46 = por %p44, %p45
    %s48 = sadd.s32 %s47, 1
    %p51 = scmp.eq.s32.totalorder %s13, 1
    %p52 = scmp.ne.s32.totalorder %s47, %s49
    %p53 = scmp.eq.s32.totalorder %s13, 0
    %p54 = por %p52, %p53
    %p55 = scmp.ne.s32.totalorder %s47, %s49
    %p56 = scmp.eq.s32.totalorder %s18, 1
    %p57 = por %p55, %p56
    %p58 = scmp.ne.s32.totalorder %s49, %s50
    %p59 = scmp.eq.s32.totalorder %s18, 0
    %p60 = por %p58, %p59
    %p61 = scmp.ne.s32.totalorder %s49, %s50
    %p62 = scmp.eq.s32.totalorder %s19, 1
    %p63 = por %p61, %p62
    %p65 = scmp.ne.s32.totalorder %s50, %s64
    %p66 = scmp.eq.s32.totalorder %s19, 0
    %p67 = por %p65, %p66
    %s69 = sadd.s32 %s68, 1
    %p72 = scmp.eq.s32.totalorder %s13, 1
    %p73 = scmp.ne.s32.totalorder %s68, %s70
    %p74 = scmp.eq.s32.totalorder %s13, 0
    %p75 = por %p73, %p74
    %p76 = scmp.ne.s32.totalorder %s68, %s70
    %p77 = scmp.eq.s32.totalorder %s18, 1
    %p78 = por %p76, %p77
    %p79 = scmp.ne.s32.totalorder %s70, %s71
    %p80 = scmp.eq.s32.totalorder %s18, 0
    %p81 = por %p79, %p80
    %p82 = scmp.ne.s32.totalorder %s70, %s71
    %p83 = scmp.eq.s32.totalorder %s19, 1
    %p84 = por %p82, %p83
    %p86 = scmp.ne.s32.totalorder %s71, %s85
    %p87 = scmp.eq.s32.totalorder %s19, 0
    %p88 = por %p86, %p87
    %s90 = sadd.s32 %s89, 1
    %p93 = scmp.eq.s32.totalorder %s13, 1
    %p94 = scmp.ne.s32.totalorder %s89, %s91
    %p95 = scmp.eq.s32.totalorder %s13, 0
    %p96 = por %p94, %p95
    %p97 = scmp.ne.s32.totalorder %s89, %s91
    %p98 = scmp.eq.s32.totalorder %s18, 1
    %p99 = por %p97, %p98
    %p100 = scmp.ne.s32.totalorder %s91, %s92
    %p101 = scmp.eq.s32.totalorder %s18, 0
    %p102 = por %p100, %p101
    %p103 = scmp.ne.s32.totalorder %s91, %s92
    %p104 = scmp.eq.s32.totalorder %s19, 1
    %p105 = por %p103, %p104
    %p107 = scmp.ne.s32.totalorder %s92, %s106
    %p108 = scmp.eq.s32.totalorder %s19, 0
    %p109 = por %p107, %p108
    %s111 = sadd.s32 %s110, 1
    %p114 = scmp.eq.s32.totalorder %s13, 1
    %p115 = scmp.ne.s32.totalorder %s110, %s112
    %p116 = scmp.eq.s32.totalorder %s13, 0
    %p117 = por %p115, %p116
    %p118 = scmp.ne.s32.totalorder %s110, %s112
    %p119 = scmp.eq.s32.totalorder %s18, 1
    %p120 = por %p118, %p119
    %p121 = scmp.ne.s32.totalorder %s112, %s113
    %p122 = scmp.eq.s32.totalorder %s18, 0
    %p123 = por %p121, %p122
    %p124 = scmp.ne.s32.totalorder %s112, %s113
    %p125 = scmp.eq.s32.totalorder %s19, 1
    %p126 = por %p124, %p125
    %p128 = scmp.ne.s32.totalorder %s113, %s127
    %p129 = scmp.eq.s32.totalorder %s19, 0
    %p130 = por %p128, %p129
    %s132 = sadd.s32 %s131, 1
    %p135 = scmp.eq.s32.totalorder %s13, 1
    %p136 = scmp.ne.s32.totalorder %s131, %s133
    %p137 = scmp.eq.s32.totalorder %s13, 0
    %p138 = por %p136, %p137
    %p139 = scmp.ne.s32.totalorder %s131, %s133
    %p140 = scmp.eq.s32.totalorder %s18, 1
    %p141 = por %p139, %p140
    %p142 = scmp.ne.s32.totalorder %s133, %s134
    %p143 = scmp.eq.s32.totalorder %s18, 0
    %p144 = por %p142, %p143
    %p145 = scmp.ne.s32.totalorder %s133, %s134
    %p146 = scmp.eq.s32.totalorder %s19, 1
    %p147 = por %p145, %p146
    %p149 = scmp.ne.s32.totalorder %s134, %s148
    %p150 = scmp.eq.s32.totalorder %s19, 0
    %p151 = por %p149, %p150
    %s153 = sadd.s32 %s152, 1
    %p156 = scmp.eq.s32.totalorder %s13, 1
    %p157 = scmp.ne.s32.totalorder %s152, %s154
    %p158 = scmp.eq.s32.totalorder %s13, 0
    %p159 = por %p157, %p158
    %p160 = scmp.ne.s32.totalorder %s152, %s154
    %p161 = scmp.eq.s32.totalorder %s18, 1
    %p162 = por %p160, %p161
    %p163 = scmp.ne.s32.totalorder %s154, %s155
    %p164 = scmp.eq.s32.totalorder %s18, 0
    %p165 = por %p163, %p164
    %p166 = scmp.ne.s32.totalorder %s154, %s155
    %p167 = scmp.eq.s32.totalorder %s19, 1
    %p168 = por %p166, %p167
    %p170 = scmp.ne.s32.totalorder %s155, %s169
    %p171 = scmp.eq.s32.totalorder %s19, 0
    %p172 = por %p170, %p171
    %s173 = ssub.s32 %s13, %s20
    %p174 = scmp.eq.s32.totalorder %s173, 0
    %s176 = sadd.s32 %s175, 1
    %s177 = scalar_select %p174, %s175, %s176
    %p180 = pneg %p174
    %p181 = scmp.eq.s32.totalorder %s13, 1
    %p182 = por %p180, %p181
    %p183 = scmp.ne.s32.totalorder %s175, %s178
    %p184 = scmp.eq.s32.totalorder %s13, 0
    %p185 = por %p183, %p184
    %p186 = scmp.ne.s32.totalorder %s175, %s178
    %p187 = scmp.eq.s32.totalorder %s18, 1
    %p188 = por %p186, %p187
    %p189 = scmp.ne.s32.totalorder %s178, %s179
    %p190 = scmp.eq.s32.totalorder %s18, 0
    %p191 = por %p189, %p190
    %p192 = scmp.ne.s32.totalorder %s178, %s179
    %p193 = scmp.eq.s32.totalorder %s19, 1
    %p194 = por %p192, %p193
    %p196 = scmp.ne.s32.totalorder %s179, %s195
    %p197 = scmp.eq.s32.totalorder %s19, 0
    %p198 = por %p196, %p197
    %p199 = scmp.le.s32.totalorder 1, %s13
    %p200 = scmp.lt.s32.totalorder %s13, 3
    %p201 = pnand %p199, %p200
    %p202 = pneg %p201
    // Predicated region
    $region9: #{actor_forward.1} parent=5 // pred_check
      _
    $region10: #{actor_forward.1} parent=5 // pred_check_branch
      %204 = sbr.rel (%p201) target = $region12
    $region11: #{actor_forward.1} parent=5 // pred_region
      %s205 = ssub.s32 %s13, 1
      // Predicated region
      $region13: #{actor_forward.1} parent=11 // pred_check
        %p206 = pneg %p60
      $region14: #{actor_forward.1} parent=11 // pred_check_branch
        %208 = sbr.rel (%p206) target = $region16
      $region15: #{actor_forward.1} parent=11 // pred_region
        _
      $region16: #{actor_forward.1} parent=11 // pred_fallthru
        _
      // Predicated region
      $region17: #{actor_forward.1} parent=11 // pred_check
        %p209 = pneg %p81
      $region18: #{actor_forward.1} parent=11 // pred_check_branch
        %211 = sbr.rel (%p209) target = $region20
      $region19: #{actor_forward.1} parent=11 // pred_region
        _
      $region20: #{actor_forward.1} parent=11 // pred_fallthru
        _
      // Predicated region
      $region21: #{actor_forward.1} parent=11 // pred_check
        %p212 = pneg %p102
      $region22: #{actor_forward.1} parent=11 // pred_check_branch
        %214 = sbr.rel (%p212) target = $region24
      $region23: #{actor_forward.1} parent=11 // pred_region
        _
      $region24: #{actor_forward.1} parent=11 // pred_fallthru
        _
      // Predicated region
      $region25: #{actor_forward.1} parent=11 // pred_check
        %p215 = pneg %p123
      $region26: #{actor_forward.1} parent=11 // pred_check_branch
        %217 = sbr.rel (%p215) target = $region28
      $region27: #{actor_forward.1} parent=11 // pred_region
        _
      $region28: #{actor_forward.1} parent=11 // pred_fallthru
        _
      // Predicated region
      $region29: #{actor_forward.1} parent=11 // pred_check
        %p218 = pneg %p144
      $region30: #{actor_forward.1} parent=11 // pred_check_branch
        %220 = sbr.rel (%p218) target = $region32
      $region31: #{actor_forward.1} parent=11 // pred_region
        _
      $region32: #{actor_forward.1} parent=11 // pred_fallthru
        _
      // Predicated region
      $region33: #{actor_forward.1} parent=11 // pred_check
        %p221 = pneg %p165
      $region34: #{actor_forward.1} parent=11 // pred_check_branch
        %223 = sbr.rel (%p221) target = $region36
      $region35: #{actor_forward.1} parent=11 // pred_region
        _
      $region36: #{actor_forward.1} parent=11 // pred_fallthru
        _
    $region12: #{actor_forward.1} parent=5 // pred_fallthru
      _
    %p224 = scmp.lt.s32.totalorder %s13, 2
    // Predicated region
    $region37: #{actor_forward.1} parent=5 // pred_check
      %p225 = pneg %p224
    $region38: #{actor_forward.1} parent=5 // pred_check_branch
      %227 = sbr.rel (%p225) target = $region40
    $region39: #{actor_forward.1} parent=5 // pred_region
      // Predicated region
      $region41: #{actor_forward.1} parent=39 // pred_check
        %p228 = pneg %p33
      $region42: #{actor_forward.1} parent=39 // pred_check_branch
        %230 = sbr.rel (%p228) target = $region44
      $region43: #{actor_forward.1} parent=39 // pred_region
        %s231 = smul.u32 16, %s13
        %p232 = scmp.lt.s32.totalorder %s231, 31
        %s233 = scalar_select %p232, %s231, 31
        %s234 = smul.addr %s233, 4
        %s235 = scalar_lea.vmem %s0, %s234
        %s236 = smul.u32 16, %s13
      $region44: #{actor_forward.1} parent=39 // pred_fallthru
        _
    $region40: #{actor_forward.1} parent=5 // pred_fallthru
      _
    %p237 = scmp.le.s32.totalorder 1, %s13
    %p238 = scmp.lt.s32.totalorder %s13, 3
    %p239 = pnand %p237, %p238
    %p240 = pneg %p239
    // Predicated region
    $region45: #{actor_forward.1} parent=5 // pred_check
      _
    $region46: #{actor_forward.1} parent=5 // pred_check_branch
      %242 = sbr.rel (%p239) target = $region48
    $region47: #{actor_forward.1} parent=5 // pred_region
      %s243 = ssub.s32 %s13, 1
      %s244 = smul.u32 16, %s18
      %p245 = scmp.lt.s32.totalorder %s244, 31
      %s246 = scalar_select %p245, %s244, 31
      %s247 = smul.addr %s246, 4
      %s248 = scalar_lea.vmem %s0, %s247
      %p249 = pneg %p39
      %p250 = pneg %p36
      %p251 = pneg %p60
      %p252 = pneg %p57
      %p253 = pneg %p81
      %p254 = pneg %p78
      %p255 = pneg %p102
      %p256 = pneg %p99
      %p257 = pneg %p123
      %p258 = pneg %p120
      %p259 = pneg %p144
      %p260 = pneg %p141
      %p261 = pneg %p165
      %p262 = pneg %p162
      %p263 = pneg %p191
      %p264 = pneg %p188
      %s265 = smul.u32 16, %s18
      %p266 = scmp.lt.s32.totalorder %s265, 31
      %s267 = scalar_select %p266, %s265, 31
      %s268 = smul.addr %s267, 8
      %s269 = scalar_lea.vmem %s7, %s268
      %s270 = smul.u32 16, %s18
      %p271 = scmp.lt.s32.totalorder %s270, 31
      %s272 = scalar_select %p271, %s270, 31
      %s273 = smul.addr %s272, 4
      %s274 = scalar_lea.vmem %s0, %s273
      %s275 = smul.u32 16, %s18
      %s276 = smul.u32 16, %s18
      %p277 = scmp.lt.s32.totalorder %s276, 31
      %s278 = scalar_select %p277, %s276, 31
      %s279 = smul.addr %s278, 8
      %s280 = scalar_lea.vmem %s7, %s279
      %s281 = smul.u32 16, %s18
      %v283 = vld [vmem:[%s274] sm:$0xf]
      %v284 = vld [vmem:[%s274 + $0x4] sm:$0xf]
      %v285 = vld [vmem:[%s274 + $0x8] sm:$0xf]
      %v286 = vld [vmem:[%s274 + $0xc] sm:$0xf]
      %v287 = vld [vmem:[%s274 + $0x10] sm:$0xf]
      %v288 = vld [vmem:[%s274 + $0x14] sm:$0xf]
      %v289 = vld [vmem:[%s274 + $0x18] sm:$0xf]
      %v290 = vld [vmem:[%s274 + $0x1c] sm:$0xf]
      %v291 = vld [vmem:[%s274 + $0x20] sm:$0xf]
      %v292 = vld [vmem:[%s274 + $0x24] sm:$0xf]
      %v293 = vld [vmem:[%s274 + $0x28] sm:$0xf]
      %v294 = vld [vmem:[%s274 + $0x2c] sm:$0xf]
      %v295 = vld [vmem:[%s274 + $0x30] sm:$0xf]
      %v296 = vld [vmem:[%s274 + $0x34] sm:$0xf]
      %v297 = vld [vmem:[%s274 + $0x38] sm:$0xf]
      %v298 = vld [vmem:[%s274 + $0x3c] sm:$0xf]
      %v299 = vld [vmem:[%s1] sm:$0xff]
      %v300 = vld [vmem:[%s1 + $0x8] sm:$0xff]
      %v301 = vld [vmem:[%s2] sm:$0x3]
      %v303 = vperm.slane %v301, 0
      %v304 = vperm.slane %v301, 1
      %v323 = vunpack.c.l.b16 %v283
      %v324 = vunpack.c.l.b16 %v284
      %v325 = vunpack.c.l.b16 %v285
      %v326 = vunpack.c.l.b16 %v286
      %v327 = vunpack.c.l.b16 %v287
      %v328 = vunpack.c.l.b16 %v288
      %v329 = vunpack.c.l.b16 %v289
      %v330 = vunpack.c.l.b16 %v290
      %v331 = vunpack.c.l.b16 %v291
      %v332 = vunpack.c.l.b16 %v292
      %v333 = vunpack.c.l.b16 %v293
      %v334 = vunpack.c.l.b16 %v294
      %v335 = vunpack.c.l.b16 %v295
      %v336 = vunpack.c.l.b16 %v296
      %v337 = vunpack.c.l.b16 %v297
      %v338 = vunpack.c.l.b16 %v298
      %v339 = vpack.c.b16 %v324, %v323
      %v340 = vpack.c.b16 %v326, %v325
      %v341 = vpack.c.b16 %v328, %v327
      %v342 = vpack.c.b16 %v330, %v329
      %v343 = vpack.c.b16 %v332, %v331
      %v344 = vpack.c.b16 %v334, %v333
      %v345 = vpack.c.b16 %v336, %v335
      %v346 = vpack.c.b16 %v338, %v337
      %v349 = vunpack.c.l.b16 %v299
      %v350 = vunpack.c.h.b16 %v299
      %v351 = vunpack.c.l.b16 %v300
      %v352 = vunpack.c.h.b16 %v300
      %v353 = vpack.c.b16 %v351, %v349
      %v354 = vpack.c.b16 %v352, %v350
      %vm357 = vcmask 130048
      %v359 = vsel %vm357, %v339, 0
      %v362 = vsel %vm357, %v340, 0
      %v365 = vsel %vm357, %v341, 0
      %v368 = vsel %vm357, %v342, 0
      %v371 = vsel %vm357, %v343, 0
      %v374 = vsel %vm357, %v344, 0
      %v377 = vsel %vm357, %v345, 0
      %v380 = vsel %vm357, %v346, 0
      %382 = vmatpush.bf16.msra.mxu0 0
      %383 = vmatpush.bf16.msra.mxu0 0
      %384 = vmatpush.bf16.msra.mxu0 0
      %385 = vmatpush.bf16.msra.mxu0 0
      %386 = vmatpush.bf16.msra.mxu0 0
      %387 = vmatpush.bf16.msra.mxu0 0
      %388 = vmatpush.bf16.msra.mxu0 0
      %389 = vmatpush.bf16.msra.mxu0 %v353
      %390 = vmatmul.bf16.gmra.mxu0 %v359
      %v391 = vpop.f32.mrf.mxu0
      %v392 = vadd.f32 %v303, %v391
      %v393 = vpop.f32.mrf.mxu0
      %v394 = vadd.f32 %v303, %v393
      %395 = vmatmul.bf16.gmra.mxu0 %v362
      %v396 = vpop.f32.mrf.mxu0
      %v397 = vadd.f32 %v303, %v396
      %v398 = vpop.f32.mrf.mxu0
      %v399 = vadd.f32 %v303, %v398
      %400 = vmatmul.bf16.gmra.mxu0 %v365
      %v401 = vpop.f32.mrf.mxu0
      %v402 = vadd.f32 %v303, %v401
      %v403 = vpop.f32.mrf.mxu0
      %v404 = vadd.f32 %v303, %v403
      %405 = vmatmul.bf16.gmra.mxu0 %v368
      %v406 = vpop.f32.mrf.mxu0
      %v407 = vadd.f32 %v303, %v406
      %v408 = vpop.f32.mrf.mxu0
      %v409 = vadd.f32 %v303, %v408
      %410 = vmatmul.bf16.gmra.mxu0 %v371
      %v411 = vpop.f32.mrf.mxu0
      %v412 = vadd.f32 %v303, %v411
      %v413 = vpop.f32.mrf.mxu0
      %v414 = vadd.f32 %v303, %v413
      %415 = vmatmul.bf16.gmra.mxu0 %v374
      %v416 = vpop.f32.mrf.mxu0
      %v417 = vadd.f32 %v303, %v416
      %v418 = vpop.f32.mrf.mxu0
      %v419 = vadd.f32 %v303, %v418
      %420 = vmatmul.bf16.gmra.mxu0 %v377
      %v421 = vpop.f32.mrf.mxu0
      %v422 = vadd.f32 %v303, %v421
      %v423 = vpop.f32.mrf.mxu0
      %v424 = vadd.f32 %v303, %v423
      %425 = vmatmul.bf16.gmra.mxu0 %v380
      %v426 = vpop.f32.mrf.mxu0
      %v427 = vadd.f32 %v303, %v426
      %v428 = vpop.f32.mrf.mxu0
      %v429 = vadd.f32 %v303, %v428
      %430 = vdwg.mxu0
      %431 = vmatpush.bf16.msra.mxu0 0
      %432 = vmatpush.bf16.msra.mxu0 0
      %433 = vmatpush.bf16.msra.mxu0 0
      %434 = vmatpush.bf16.msra.mxu0 0
      %435 = vmatpush.bf16.msra.mxu0 0
      %436 = vmatpush.bf16.msra.mxu0 0
      %437 = vmatpush.bf16.msra.mxu0 0
      %438 = vmatpush.bf16.msra.mxu0 %v354
      %439 = vmatmul.bf16.gmra.mxu0 %v359
      %v440 = vpop.f32.mrf.mxu0
      %v441 = vadd.f32 %v304, %v440
      %v442 = vpop.f32.mrf.mxu0
      %v443 = vadd.f32 %v304, %v442
      %444 = vmatmul.bf16.gmra.mxu0 %v362
      %v445 = vpop.f32.mrf.mxu0
      %v446 = vadd.f32 %v304, %v445
      %v447 = vpop.f32.mrf.mxu0
      %v448 = vadd.f32 %v304, %v447
      %449 = vmatmul.bf16.gmra.mxu0 %v365
      %v450 = vpop.f32.mrf.mxu0
      %v451 = vadd.f32 %v304, %v450
      %v452 = vpop.f32.mrf.mxu0
      %v453 = vadd.f32 %v304, %v452
      %454 = vmatmul.bf16.gmra.mxu0 %v368
      %v455 = vpop.f32.mrf.mxu0
      %v456 = vadd.f32 %v304, %v455
      %v457 = vpop.f32.mrf.mxu0
      %v458 = vadd.f32 %v304, %v457
      %459 = vmatmul.bf16.gmra.mxu0 %v371
      %v460 = vpop.f32.mrf.mxu0
      %v461 = vadd.f32 %v304, %v460
      %v462 = vpop.f32.mrf.mxu0
      %v463 = vadd.f32 %v304, %v462
      %464 = vmatmul.bf16.gmra.mxu0 %v374
      %v465 = vpop.f32.mrf.mxu0
      %v466 = vadd.f32 %v304, %v465
      %v467 = vpop.f32.mrf.mxu0
      %v468 = vadd.f32 %v304, %v467
      %469 = vmatmul.bf16.gmra.mxu0 %v377
      %v470 = vpop.f32.mrf.mxu0
      %v471 = vadd.f32 %v304, %v470
      %v472 = vpop.f32.mrf.mxu0
      %v473 = vadd.f32 %v304, %v472
      %474 = vmatmul.bf16.gmra.mxu0 %v380
      %v475 = vpop.f32.mrf.mxu0
      %v476 = vadd.f32 %v304, %v475
      %v477 = vpop.f32.mrf.mxu0
      %v478 = vadd.f32 %v304, %v477
      %479 = vdwg.mxu0
      %v480 = vmax.f32 %v392, 0.0
      %v481 = vmax.f32 %v441, 0.0
      %v482 = vmax.f32 %v394, 0.0
      %v483 = vmax.f32 %v443, 0.0
      %v484 = vmax.f32 %v397, 0.0
      %v485 = vmax.f32 %v446, 0.0
      %v486 = vmax.f32 %v399, 0.0
      %v487 = vmax.f32 %v448, 0.0
      %v488 = vmax.f32 %v402, 0.0
      %v489 = vmax.f32 %v451, 0.0
      %v490 = vmax.f32 %v404, 0.0
      %v491 = vmax.f32 %v453, 0.0
      %v492 = vmax.f32 %v407, 0.0
      %v493 = vmax.f32 %v456, 0.0
      %v494 = vmax.f32 %v409, 0.0
      %v495 = vmax.f32 %v458, 0.0
      %v496 = vmax.f32 %v412, 0.0
      %v497 = vmax.f32 %v461, 0.0
      %v498 = vmax.f32 %v414, 0.0
      %v499 = vmax.f32 %v463, 0.0
      %v500 = vmax.f32 %v417, 0.0
      %v501 = vmax.f32 %v466, 0.0
      %v502 = vmax.f32 %v419, 0.0
      %v503 = vmax.f32 %v468, 0.0
      %v504 = vmax.f32 %v422, 0.0
      %v505 = vmax.f32 %v471, 0.0
      %v506 = vmax.f32 %v424, 0.0
      %v507 = vmax.f32 %v473, 0.0
      %v508 = vmax.f32 %v427, 0.0
      %v509 = vmax.f32 %v476, 0.0
      %v510 = vmax.f32 %v429, 0.0
      %v511 = vmax.f32 %v478, 0.0
      %v512 = vpack.c.bf16 %v482, %v480
      %v513 = vpack.c.bf16 %v483, %v481
      %v514 = vpack.c.bf16 %v486, %v484
      %v515 = vpack.c.bf16 %v487, %v485
      %v516 = vpack.c.bf16 %v490, %v488
      %v517 = vpack.c.bf16 %v491, %v489
      %v518 = vpack.c.bf16 %v494, %v492
      %v519 = vpack.c.bf16 %v495, %v493
      %v520 = vpack.c.bf16 %v498, %v496
      %v521 = vpack.c.bf16 %v499, %v497
      %v522 = vpack.c.bf16 %v502, %v500
      %v523 = vpack.c.bf16 %v503, %v501
      %v524 = vpack.c.bf16 %v506, %v504
      %v525 = vpack.c.bf16 %v507, %v505
      %v526 = vpack.c.bf16 %v510, %v508
      %v527 = vpack.c.bf16 %v511, %v509
      %v528 = vld [vmem:[%s3] sm:$0xff]
      %v529 = vld [vmem:[%s3 + $0x8] sm:$0xff]
      %v530 = vld [vmem:[%s3 + $0x10] sm:$0xff]
      %v531 = vld [vmem:[%s3 + $0x18] sm:$0xff]
      %v532 = vld [vmem:[%s3 + $0x20] sm:$0xff]
      %v533 = vld [vmem:[%s3 + $0x28] sm:$0xff]
      %v534 = vld [vmem:[%s3 + $0x30] sm:$0xff]
      %v535 = vld [vmem:[%s3 + $0x38] sm:$0xff]
      %v536 = vld [vmem:[%s3 + $0x40] sm:$0xff]
      %v537 = vld [vmem:[%s3 + $0x48] sm:$0xff]
      %v538 = vld [vmem:[%s3 + $0x50] sm:$0xff]
      %v539 = vld [vmem:[%s3 + $0x58] sm:$0xff]
      %v540 = vld [vmem:[%s3 + $0x60] sm:$0xff]
      %v541 = vld [vmem:[%s3 + $0x68] sm:$0xff]
      %v542 = vld [vmem:[%s3 + $0x70] sm:$0xff]
      %v543 = vld [vmem:[%s3 + $0x78] sm:$0xff]
      %v544 = vld [vmem:[%s3 + $0x80] sm:$0xff]
      %v545 = vld [vmem:[%s3 + $0x88] sm:$0xff]
      %v546 = vld [vmem:[%s3 + $0x90] sm:$0xff]
      %v547 = vld [vmem:[%s3 + $0x98] sm:$0xff]
      %v548 = vld [vmem:[%s3 + $0xa0] sm:$0xff]
      %v549 = vld [vmem:[%s3 + $0xa8] sm:$0xff]
      %v550 = vld [vmem:[%s3 + $0xb0] sm:$0xff]
      %v551 = vld [vmem:[%s3 + $0xb8] sm:$0xff]
      %v552 = vld [vmem:[%s3 + $0xc0] sm:$0xff]
      %v553 = vld [vmem:[%s3 + $0xc8] sm:$0xff]
      %v554 = vld [vmem:[%s3 + $0xd0] sm:$0xff]
      %v555 = vld [vmem:[%s3 + $0xd8] sm:$0xff]
      %v556 = vld [vmem:[%s3 + $0xe0] sm:$0xff]
      %v557 = vld [vmem:[%s3 + $0xe8] sm:$0xff]
      %v558 = vld [vmem:[%s3 + $0xf0] sm:$0xff]
      %v559 = vld [vmem:[%s3 + $0xf8] sm:$0xff]
      %v560 = vld [vmem:[%s4] sm:$0x3]
      %v562 = vperm.slane %v560, 0
      %v563 = vperm.slane %v560, 1
      %v598 = vunpack.c.l.b16 %v528
      %v599 = vunpack.c.h.b16 %v528
      %v600 = vunpack.c.l.b16 %v529
      %v601 = vunpack.c.h.b16 %v529
      %v602 = vunpack.c.l.b16 %v530
      %v603 = vunpack.c.h.b16 %v530
      %v604 = vunpack.c.l.b16 %v531
      %v605 = vunpack.c.h.b16 %v531
      %v606 = vunpack.c.l.b16 %v532
      %v607 = vunpack.c.h.b16 %v532
      %v608 = vunpack.c.l.b16 %v533
      %v609 = vunpack.c.h.b16 %v533
      %v610 = vunpack.c.l.b16 %v534
      %v611 = vunpack.c.h.b16 %v534
      %v612 = vunpack.c.l.b16 %v535
      %v613 = vunpack.c.h.b16 %v535
      %v614 = vunpack.c.l.b16 %v536
      %v615 = vunpack.c.h.b16 %v536
      %v616 = vunpack.c.l.b16 %v537
      %v617 = vunpack.c.h.b16 %v537
      %v618 = vunpack.c.l.b16 %v538
      %v619 = vunpack.c.h.b16 %v538
      %v620 = vunpack.c.l.b16 %v539
      %v621 = vunpack.c.h.b16 %v539
      %v622 = vunpack.c.l.b16 %v540
      %v623 = vunpack.c.h.b16 %v540
      %v624 = vunpack.c.l.b16 %v541
      %v625 = vunpack.c.h.b16 %v541
      %v626 = vunpack.c.l.b16 %v542
      %v627 = vunpack.c.h.b16 %v542
      %v628 = vunpack.c.l.b16 %v543
      %v629 = vunpack.c.h.b16 %v543
      %v630 = vunpack.c.l.b16 %v544
      %v631 = vunpack.c.h.b16 %v544
      %v632 = vunpack.c.l.b16 %v545
      %v633 = vunpack.c.h.b16 %v545
      %v634 = vunpack.c.l.b16 %v546
      %v635 = vunpack.c.h.b16 %v546
      %v636 = vunpack.c.l.b16 %v547
      %v637 = vunpack.c.h.b16 %v547
      %v638 = vunpack.c.l.b16 %v548
      %v639 = vunpack.c.h.b16 %v548
      %v640 = vunpack.c.l.b16 %v549
      %v641 = vunpack.c.h.b16 %v549
      %v642 = vunpack.c.l.b16 %v550
      %v643 = vunpack.c.h.b16 %v550
      %v644 = vunpack.c.l.b16 %v551
      %v645 = vunpack.c.h.b16 %v551
      %v646 = vunpack.c.l.b16 %v552
      %v647 = vunpack.c.h.b16 %v552
      %v648 = vunpack.c.l.b16 %v553
      %v649 = vunpack.c.h.b16 %v553
      %v650 = vunpack.c.l.b16 %v554
      %v651 = vunpack.c.h.b16 %v554
      %v652 = vunpack.c.l.b16 %v555
      %v653 = vunpack.c.h.b16 %v555
      %v654 = vunpack.c.l.b16 %v556
      %v655 = vunpack.c.h.b16 %v556
      %v656 = vunpack.c.l.b16 %v557
      %v657 = vunpack.c.h.b16 %v557
      %v658 = vunpack.c.l.b16 %v558
      %v659 = vunpack.c.h.b16 %v558
      %v660 = vunpack.c.l.b16 %v559
      %v661 = vunpack.c.h.b16 %v559
      %v662 = vpack.c.b16 %v600, %v598
      %v663 = vpack.c.b16 %v601, %v599
      %v664 = vpack.c.b16 %v604, %v602
      %v665 = vpack.c.b16 %v605, %v603
      %v666 = vpack.c.b16 %v608, %v606
      %v667 = vpack.c.b16 %v609, %v607
      %v668 = vpack.c.b16 %v612, %v610
      %v669 = vpack.c.b16 %v613, %v611
      %v670 = vpack.c.b16 %v616, %v614
      %v671 = vpack.c.b16 %v617, %v615
      %v672 = vpack.c.b16 %v620, %v618
      %v673 = vpack.c.b16 %v621, %v619
      %v674 = vpack.c.b16 %v624, %v622
      %v675 = vpack.c.b16 %v625, %v623
      %v676 = vpack.c.b16 %v628, %v626
      %v677 = vpack.c.b16 %v629, %v627
      %v678 = vpack.c.b16 %v632, %v630
      %v679 = vpack.c.b16 %v633, %v631
      %v680 = vpack.c.b16 %v636, %v634
      %v681 = vpack.c.b16 %v637, %v635
      %v682 = vpack.c.b16 %v640, %v638
      %v683 = vpack.c.b16 %v641, %v639
      %v684 = vpack.c.b16 %v644, %v642
      %v685 = vpack.c.b16 %v645, %v643
      %v686 = vpack.c.b16 %v648, %v646
      %v687 = vpack.c.b16 %v649, %v647
      %v688 = vpack.c.b16 %v652, %v650
      %v689 = vpack.c.b16 %v653, %v651
      %v690 = vpack.c.b16 %v656, %v654
      %v691 = vpack.c.b16 %v657, %v655
      %v692 = vpack.c.b16 %v660, %v658
      %v693 = vpack.c.b16 %v661, %v659
      %726 = vmatpush.bf16.msra.mxu0 %v676
      %727 = vmatpush.bf16.msra.mxu0 %v674
      %728 = vmatpush.bf16.msra.mxu0 %v672
      %729 = vmatpush.bf16.msra.mxu0 %v670
      %730 = vmatpush.bf16.msra.mxu0 %v668
      %731 = vmatpush.bf16.msra.mxu0 %v666
      %732 = vmatpush.bf16.msra.mxu0 %v664
      %733 = vmatpush.bf16.msra.mxu0 %v662
      %734 = vmatmul.bf16.gmra.mxu0 %v512
      %v735 = vpop.f32.mrf.mxu0
      %v736 = vadd.f32 %v562, %v735
      %v737 = vpop.f32.mrf.mxu0
      %v738 = vadd.f32 %v562, %v737
      %739 = vmatmul.bf16.gmra.mxu0 %v514
      %v740 = vpop.f32.mrf.mxu0
      %v741 = vadd.f32 %v562, %v740
      %v742 = vpop.f32.mrf.mxu0
      %v743 = vadd.f32 %v562, %v742
      %744 = vmatmul.bf16.gmra.mxu0 %v516
      %v745 = vpop.f32.mrf.mxu0
      %v746 = vadd.f32 %v562, %v745
      %v747 = vpop.f32.mrf.mxu0
      %v748 = vadd.f32 %v562, %v747
      %749 = vmatmul.bf16.gmra.mxu0 %v518
      %v750 = vpop.f32.mrf.mxu0
      %v751 = vadd.f32 %v562, %v750
      %v752 = vpop.f32.mrf.mxu0
      %v753 = vadd.f32 %v562, %v752
      %754 = vmatmul.bf16.gmra.mxu0 %v520
      %v755 = vpop.f32.mrf.mxu0
      %v756 = vadd.f32 %v562, %v755
      %v757 = vpop.f32.mrf.mxu0
      %v758 = vadd.f32 %v562, %v757
      %759 = vmatmul.bf16.gmra.mxu0 %v522
      %v760 = vpop.f32.mrf.mxu0
      %v761 = vadd.f32 %v562, %v760
      %v762 = vpop.f32.mrf.mxu0
      %v763 = vadd.f32 %v562, %v762
      %764 = vmatmul.bf16.gmra.mxu0 %v524
      %v765 = vpop.f32.mrf.mxu0
      %v766 = vadd.f32 %v562, %v765
      %v767 = vpop.f32.mrf.mxu0
      %v768 = vadd.f32 %v562, %v767
      %769 = vmatmul.bf16.gmra.mxu0 %v526
      %v770 = vpop.f32.mrf.mxu0
      %v771 = vadd.f32 %v562, %v770
      %v772 = vpop.f32.mrf.mxu0
      %v773 = vadd.f32 %v562, %v772
      %774 = vdwg.mxu0
      %775 = vmatpush.bf16.msra.mxu0 %v692
      %776 = vmatpush.bf16.msra.mxu0 %v690
      %777 = vmatpush.bf16.msra.mxu0 %v688
      %778 = vmatpush.bf16.msra.mxu0 %v686
      %779 = vmatpush.bf16.msra.mxu0 %v684
      %780 = vmatpush.bf16.msra.mxu0 %v682
      %781 = vmatpush.bf16.msra.mxu0 %v680
      %782 = vmatpush.bf16.msra.mxu0 %v678
      %783 = vmatmul.bf16.gmra.mxu0 %v513
      %v784 = vpop.f32.mrf.mxu0
      %v785 = vadd.f32 %v736, %v784
      %v786 = vpop.f32.mrf.mxu0
      %v787 = vadd.f32 %v738, %v786
      %788 = vmatmul.bf16.gmra.mxu0 %v515
      %v789 = vpop.f32.mrf.mxu0
      %v790 = vadd.f32 %v741, %v789
      %v791 = vpop.f32.mrf.mxu0
      %v792 = vadd.f32 %v743, %v791
      %793 = vmatmul.bf16.gmra.mxu0 %v517
      %v794 = vpop.f32.mrf.mxu0
      %v795 = vadd.f32 %v746, %v794
      %v796 = vpop.f32.mrf.mxu0
      %v797 = vadd.f32 %v748, %v796
      %798 = vmatmul.bf16.gmra.mxu0 %v519
      %v799 = vpop.f32.mrf.mxu0
      %v800 = vadd.f32 %v751, %v799
      %v801 = vpop.f32.mrf.mxu0
      %v802 = vadd.f32 %v753, %v801
      %803 = vmatmul.bf16.gmra.mxu0 %v521
      %v804 = vpop.f32.mrf.mxu0
      %v805 = vadd.f32 %v756, %v804
      %v806 = vpop.f32.mrf.mxu0
      %v807 = vadd.f32 %v758, %v806
      %808 = vmatmul.bf16.gmra.mxu0 %v523
      %v809 = vpop.f32.mrf.mxu0
      %v810 = vadd.f32 %v761, %v809
      %v811 = vpop.f32.mrf.mxu0
      %v812 = vadd.f32 %v763, %v811
      %813 = vmatmul.bf16.gmra.mxu0 %v525
      %v814 = vpop.f32.mrf.mxu0
      %v815 = vadd.f32 %v766, %v814
      %v816 = vpop.f32.mrf.mxu0
      %v817 = vadd.f32 %v768, %v816
      %818 = vmatmul.bf16.gmra.mxu0 %v527
      %v819 = vpop.f32.mrf.mxu0
      %v820 = vadd.f32 %v771, %v819
      %v821 = vpop.f32.mrf.mxu0
      %v822 = vadd.f32 %v773, %v821
      %823 = vdwg.mxu0
      %824 = vmatpush.bf16.msra.mxu0 %v677
      %825 = vmatpush.bf16.msra.mxu0 %v675
      %826 = vmatpush.bf16.msra.mxu0 %v673
      %827 = vmatpush.bf16.msra.mxu0 %v671
      %828 = vmatpush.bf16.msra.mxu0 %v669
      %829 = vmatpush.bf16.msra.mxu0 %v667
      %830 = vmatpush.bf16.msra.mxu0 %v665
      %831 = vmatpush.bf16.msra.mxu0 %v663
      %832 = vmatmul.bf16.gmra.mxu0 %v512
      %v833 = vpop.f32.mrf.mxu0
      %v834 = vadd.f32 %v563, %v833
      %v835 = vpop.f32.mrf.mxu0
      %v836 = vadd.f32 %v563, %v835
      %837 = vmatmul.bf16.gmra.mxu0 %v514
      %v838 = vpop.f32.mrf.mxu0
      %v839 = vadd.f32 %v563, %v838
      %v840 = vpop.f32.mrf.mxu0
      %v841 = vadd.f32 %v563, %v840
      %842 = vmatmul.bf16.gmra.mxu0 %v516
      %v843 = vpop.f32.mrf.mxu0
      %v844 = vadd.f32 %v563, %v843
      %v845 = vpop.f32.mrf.mxu0
      %v846 = vadd.f32 %v563, %v845
      %847 = vmatmul.bf16.gmra.mxu0 %v518
      %v848 = vpop.f32.mrf.mxu0
      %v849 = vadd.f32 %v563, %v848
      %v850 = vpop.f32.mrf.mxu0
      %v851 = vadd.f32 %v563, %v850
      %852 = vmatmul.bf16.gmra.mxu0 %v520
      %v853 = vpop.f32.mrf.mxu0
      %v854 = vadd.f32 %v563, %v853
      %v855 = vpop.f32.mrf.mxu0
      %v856 = vadd.f32 %v563, %v855
      %857 = vmatmul.bf16.gmra.mxu0 %v522
      %v858 = vpop.f32.mrf.mxu0
      %v859 = vadd.f32 %v563, %v858
      %v860 = vpop.f32.mrf.mxu0
      %v861 = vadd.f32 %v563, %v860
      %862 = vmatmul.bf16.gmra.mxu0 %v524
      %v863 = vpop.f32.mrf.mxu0
      %v864 = vadd.f32 %v563, %v863
      %v865 = vpop.f32.mrf.mxu0
      %v866 = vadd.f32 %v563, %v865
      %867 = vmatmul.bf16.gmra.mxu0 %v526
      %v868 = vpop.f32.mrf.mxu0
      %v869 = vadd.f32 %v563, %v868
      %v870 = vpop.f32.mrf.mxu0
      %v871 = vadd.f32 %v563, %v870
      %872 = vdwg.mxu0
      %873 = vmatpush.bf16.msra.mxu0 %v693
      %874 = vmatpush.bf16.msra.mxu0 %v691
      %875 = vmatpush.bf16.msra.mxu0 %v689
      %876 = vmatpush.bf16.msra.mxu0 %v687
      %877 = vmatpush.bf16.msra.mxu0 %v685
      %878 = vmatpush.bf16.msra.mxu0 %v683
      %879 = vmatpush.bf16.msra.mxu0 %v681
      %880 = vmatpush.bf16.msra.mxu0 %v679
      %881 = vmatmul.bf16.gmra.mxu0 %v513
      %v882 = vpop.f32.mrf.mxu0
      %v883 = vadd.f32 %v834, %v882
      %v884 = vpop.f32.mrf.mxu0
      %v885 = vadd.f32 %v836, %v884
      %886 = vmatmul.bf16.gmra.mxu0 %v515
      %v887 = vpop.f32.mrf.mxu0
      %v888 = vadd.f32 %v839, %v887
      %v889 = vpop.f32.mrf.mxu0
      %v890 = vadd.f32 %v841, %v889
      %891 = vmatmul.bf16.gmra.mxu0 %v517
      %v892 = vpop.f32.mrf.mxu0
      %v893 = vadd.f32 %v844, %v892
      %v894 = vpop.f32.mrf.mxu0
      %v895 = vadd.f32 %v846, %v894
      %896 = vmatmul.bf16.gmra.mxu0 %v519
      %v897 = vpop.f32.mrf.mxu0
      %v898 = vadd.f32 %v849, %v897
      %v899 = vpop.f32.mrf.mxu0
      %v900 = vadd.f32 %v851, %v899
      %901 = vmatmul.bf16.gmra.mxu0 %v521
      %v902 = vpop.f32.mrf.mxu0
      %v903 = vadd.f32 %v854, %v902
      %v904 = vpop.f32.mrf.mxu0
      %v905 = vadd.f32 %v856, %v904
      %906 = vmatmul.bf16.gmra.mxu0 %v523
      %v907 = vpop.f32.mrf.mxu0
      %v908 = vadd.f32 %v859, %v907
      %v909 = vpop.f32.mrf.mxu0
      %v910 = vadd.f32 %v861, %v909
      %911 = vmatmul.bf16.gmra.mxu0 %v525
      %v912 = vpop.f32.mrf.mxu0
      %v913 = vadd.f32 %v864, %v912
      %v914 = vpop.f32.mrf.mxu0
      %v915 = vadd.f32 %v866, %v914
      %916 = vmatmul.bf16.gmra.mxu0 %v527
      %v917 = vpop.f32.mrf.mxu0
      %v918 = vadd.f32 %v869, %v917
      %v919 = vpop.f32.mrf.mxu0
      %v920 = vadd.f32 %v871, %v919
      %921 = vdwg.mxu0
      %v922 = vmax.f32 %v785, 0.0
      %v923 = vmax.f32 %v883, 0.0
      %v924 = vmax.f32 %v787, 0.0
      %v925 = vmax.f32 %v885, 0.0
      %v926 = vmax.f32 %v790, 0.0
      %v927 = vmax.f32 %v888, 0.0
      %v928 = vmax.f32 %v792, 0.0
      %v929 = vmax.f32 %v890, 0.0
      %v930 = vmax.f32 %v795, 0.0
      %v931 = vmax.f32 %v893, 0.0
      %v932 = vmax.f32 %v797, 0.0
      %v933 = vmax.f32 %v895, 0.0
      %v934 = vmax.f32 %v800, 0.0
      %v935 = vmax.f32 %v898, 0.0
      %v936 = vmax.f32 %v802, 0.0
      %v937 = vmax.f32 %v900, 0.0
      %v938 = vmax.f32 %v805, 0.0
      %v939 = vmax.f32 %v903, 0.0
      %v940 = vmax.f32 %v807, 0.0
      %v941 = vmax.f32 %v905, 0.0
      %v942 = vmax.f32 %v810, 0.0
      %v943 = vmax.f32 %v908, 0.0
      %v944 = vmax.f32 %v812, 0.0
      %v945 = vmax.f32 %v910, 0.0
      %v946 = vmax.f32 %v815, 0.0
      %v947 = vmax.f32 %v913, 0.0
      %v948 = vmax.f32 %v817, 0.0
      %v949 = vmax.f32 %v915, 0.0
      %v950 = vmax.f32 %v820, 0.0
      %v951 = vmax.f32 %v918, 0.0
      %v952 = vmax.f32 %v822, 0.0
      %v953 = vmax.f32 %v920, 0.0
      %v954 = vpack.c.bf16 %v924, %v922
      %v955 = vpack.c.bf16 %v925, %v923
      %v956 = vpack.c.bf16 %v928, %v926
      %v957 = vpack.c.bf16 %v929, %v927
      %v958 = vpack.c.bf16 %v932, %v930
      %v959 = vpack.c.bf16 %v933, %v931
      %v960 = vpack.c.bf16 %v936, %v934
      %v961 = vpack.c.bf16 %v937, %v935
      %v962 = vpack.c.bf16 %v940, %v938
      %v963 = vpack.c.bf16 %v941, %v939
      %v964 = vpack.c.bf16 %v944, %v942
      %v965 = vpack.c.bf16 %v945, %v943
      %v966 = vpack.c.bf16 %v948, %v946
      %v967 = vpack.c.bf16 %v949, %v947
      %v968 = vpack.c.bf16 %v952, %v950
      %v969 = vpack.c.bf16 %v953, %v951
      %v970 = vld [vmem:[%s5] sm:$0xf]
      %v971 = vld [vmem:[%s5 + $0x4] sm:$0xf]
      %v972 = vld [vmem:[%s5 + $0x8] sm:$0xf]
      %v973 = vld [vmem:[%s5 + $0xc] sm:$0xf]
      %v974 = vld [vmem:[%s5 + $0x10] sm:$0xf]
      %v975 = vld [vmem:[%s5 + $0x14] sm:$0xf]
      %v976 = vld [vmem:[%s5 + $0x18] sm:$0xf]
      %v977 = vld [vmem:[%s5 + $0x1c] sm:$0xf]
      %v978 = vld [vmem:[%s5 + $0x20] sm:$0xf]
      %v979 = vld [vmem:[%s5 + $0x24] sm:$0xf]
      %v980 = vld [vmem:[%s5 + $0x28] sm:$0xf]
      %v981 = vld [vmem:[%s5 + $0x2c] sm:$0xf]
      %v982 = vld [vmem:[%s5 + $0x30] sm:$0xf]
      %v983 = vld [vmem:[%s5 + $0x34] sm:$0xf]
      %v984 = vld [vmem:[%s5 + $0x38] sm:$0xf]
      %v985 = vld [vmem:[%s5 + $0x3c] sm:$0xf]
      %v986 = vld [vmem:[%s5 + $0x40] sm:$0xf]
      %v987 = vld [vmem:[%s5 + $0x44] sm:$0xf]
      %v988 = vld [vmem:[%s5 + $0x48] sm:$0xf]
      %v989 = vld [vmem:[%s5 + $0x4c] sm:$0xf]
      %v990 = vld [vmem:[%s5 + $0x50] sm:$0xf]
      %v991 = vld [vmem:[%s5 + $0x54] sm:$0xf]
      %v992 = vld [vmem:[%s5 + $0x58] sm:$0xf]
      %v993 = vld [vmem:[%s5 + $0x5c] sm:$0xf]
      %v994 = vld [vmem:[%s5 + $0x60] sm:$0xf]
      %v995 = vld [vmem:[%s5 + $0x64] sm:$0xf]
      %v996 = vld [vmem:[%s5 + $0x68] sm:$0xf]
      %v997 = vld [vmem:[%s5 + $0x6c] sm:$0xf]
      %v998 = vld [vmem:[%s5 + $0x70] sm:$0xf]
      %v999 = vld [vmem:[%s5 + $0x74] sm:$0xf]
      %v1000 = vld [vmem:[%s5 + $0x78] sm:$0xf]
      %v1001 = vld [vmem:[%s5 + $0x7c] sm:$0xf]
      %v1002 = vld [vmem:[%s6] sm:$0x1]
      %v1004 = vperm.slane %v1002, 0
      %v1038 = vunpack.c.l.b16 %v970
      %v1039 = vunpack.c.l.b16 %v971
      %v1040 = vunpack.c.l.b16 %v972
      %v1041 = vunpack.c.l.b16 %v973
      %v1042 = vunpack.c.l.b16 %v974
      %v1043 = vunpack.c.l.b16 %v975
      %v1044 = vunpack.c.l.b16 %v976
      %v1045 = vunpack.c.l.b16 %v977
      %v1046 = vunpack.c.l.b16 %v978
      %v1047 = vunpack.c.l.b16 %v979
      %v1048 = vunpack.c.l.b16 %v980
      %v1049 = vunpack.c.l.b16 %v981
      %v1050 = vunpack.c.l.b16 %v982
      %v1051 = vunpack.c.l.b16 %v983
      %v1052 = vunpack.c.l.b16 %v984
      %v1053 = vunpack.c.l.b16 %v985
      %v1054 = vunpack.c.l.b16 %v986
      %v1055 = vunpack.c.l.b16 %v987
      %v1056 = vunpack.c.l.b16 %v988
      %v1057 = vunpack.c.l.b16 %v989
      %v1058 = vunpack.c.l.b16 %v990
      %v1059 = vunpack.c.l.b16 %v991
      %v1060 = vunpack.c.l.b16 %v992
      %v1061 = vunpack.c.l.b16 %v993
      %v1062 = vunpack.c.l.b16 %v994
      %v1063 = vunpack.c.l.b16 %v995
      %v1064 = vunpack.c.l.b16 %v996
      %v1065 = vunpack.c.l.b16 %v997
      %v1066 = vunpack.c.l.b16 %v998
      %v1067 = vunpack.c.l.b16 %v999
      %v1068 = vunpack.c.l.b16 %v1000
      %v1069 = vunpack.c.l.b16 %v1001
      %v1070 = vpack.c.b16 %v1039, %v1038
      %v1071 = vpack.c.b16 %v1041, %v1040
      %v1072 = vpack.c.b16 %v1043, %v1042
      %v1073 = vpack.c.b16 %v1045, %v1044
      %v1074 = vpack.c.b16 %v1047, %v1046
      %v1075 = vpack.c.b16 %v1049, %v1048
      %v1076 = vpack.c.b16 %v1051, %v1050
      %v1077 = vpack.c.b16 %v1053, %v1052
      %v1078 = vpack.c.b16 %v1055, %v1054
      %v1079 = vpack.c.b16 %v1057, %v1056
      %v1080 = vpack.c.b16 %v1059, %v1058
      %v1081 = vpack.c.b16 %v1061, %v1060
      %v1082 = vpack.c.b16 %v1063, %v1062
      %v1083 = vpack.c.b16 %v1065, %v1064
      %v1084 = vpack.c.b16 %v1067, %v1066
      %v1085 = vpack.c.b16 %v1069, %v1068
      %1102 = vmatpush.bf16.msra.mxu0 %v1077
      %1103 = vmatpush.bf16.msra.mxu0 %v1076
      %1104 = vmatpush.bf16.msra.mxu0 %v1075
      %1105 = vmatpush.bf16.msra.mxu0 %v1074
      %1106 = vmatpush.bf16.msra.mxu0 %v1073
      %1107 = vmatpush.bf16.msra.mxu0 %v1072
      %1108 = vmatpush.bf16.msra.mxu0 %v1071
      %1109 = vmatpush.bf16.msra.mxu0 %v1070
      %1110 = vmatmul.bf16.gmra.mxu0 %v954
      %v1111 = vpop.f32.mrf.mxu0
      %v1112 = vadd.f32 %v1004, %v1111
      %v1113 = vpop.f32.mrf.mxu0
      %v1114 = vadd.f32 %v1004, %v1113
      %1115 = vmatmul.bf16.gmra.mxu0 %v956
      %v1116 = vpop.f32.mrf.mxu0
      %v1117 = vadd.f32 %v1004, %v1116
      %v1118 = vpop.f32.mrf.mxu0
      %v1119 = vadd.f32 %v1004, %v1118
      %1120 = vmatmul.bf16.gmra.mxu0 %v958
      %v1121 = vpop.f32.mrf.mxu0
      %v1122 = vadd.f32 %v1004, %v1121
      %v1123 = vpop.f32.mrf.mxu0
      %v1124 = vadd.f32 %v1004, %v1123
      %1125 = vmatmul.bf16.gmra.mxu0 %v960
      %v1126 = vpop.f32.mrf.mxu0
      %v1127 = vadd.f32 %v1004, %v1126
      %v1128 = vpop.f32.mrf.mxu0
      %v1129 = vadd.f32 %v1004, %v1128
      %1130 = vmatmul.bf16.gmra.mxu0 %v962
      %v1131 = vpop.f32.mrf.mxu0
      %v1132 = vadd.f32 %v1004, %v1131
      %v1133 = vpop.f32.mrf.mxu0
      %v1134 = vadd.f32 %v1004, %v1133
      %1135 = vmatmul.bf16.gmra.mxu0 %v964
      %v1136 = vpop.f32.mrf.mxu0
      %v1137 = vadd.f32 %v1004, %v1136
      %v1138 = vpop.f32.mrf.mxu0
      %v1139 = vadd.f32 %v1004, %v1138
      %1140 = vmatmul.bf16.gmra.mxu0 %v966
      %v1141 = vpop.f32.mrf.mxu0
      %v1142 = vadd.f32 %v1004, %v1141
      %v1143 = vpop.f32.mrf.mxu0
      %v1144 = vadd.f32 %v1004, %v1143
      %1145 = vmatmul.bf16.gmra.mxu0 %v968
      %v1146 = vpop.f32.mrf.mxu0
      %v1147 = vadd.f32 %v1004, %v1146
      %v1148 = vpop.f32.mrf.mxu0
      %v1149 = vadd.f32 %v1004, %v1148
      %1150 = vdwg.mxu0
      %1151 = vmatpush.bf16.msra.mxu0 %v1085
      %1152 = vmatpush.bf16.msra.mxu0 %v1084
      %1153 = vmatpush.bf16.msra.mxu0 %v1083
      %1154 = vmatpush.bf16.msra.mxu0 %v1082
      %1155 = vmatpush.bf16.msra.mxu0 %v1081
      %1156 = vmatpush.bf16.msra.mxu0 %v1080
      %1157 = vmatpush.bf16.msra.mxu0 %v1079
      %1158 = vmatpush.bf16.msra.mxu0 %v1078
      %1159 = vmatmul.bf16.gmra.mxu0 %v955
      %v1160 = vpop.f32.mrf.mxu0
      %v1161 = vadd.f32 %v1112, %v1160
      %v1162 = vpop.f32.mrf.mxu0
      %v1163 = vadd.f32 %v1114, %v1162
      %1164 = vmatmul.bf16.gmra.mxu0 %v957
      %v1165 = vpop.f32.mrf.mxu0
      %v1166 = vadd.f32 %v1117, %v1165
      %v1167 = vpop.f32.mrf.mxu0
      %v1168 = vadd.f32 %v1119, %v1167
      %1169 = vmatmul.bf16.gmra.mxu0 %v959
      %v1170 = vpop.f32.mrf.mxu0
      %v1171 = vadd.f32 %v1122, %v1170
      %v1172 = vpop.f32.mrf.mxu0
      %v1173 = vadd.f32 %v1124, %v1172
      %1174 = vmatmul.bf16.gmra.mxu0 %v961
      %v1175 = vpop.f32.mrf.mxu0
      %v1176 = vadd.f32 %v1127, %v1175
      %v1177 = vpop.f32.mrf.mxu0
      %v1178 = vadd.f32 %v1129, %v1177
      %1179 = vmatmul.bf16.gmra.mxu0 %v963
      %v1180 = vpop.f32.mrf.mxu0
      %v1181 = vadd.f32 %v1132, %v1180
      %v1182 = vpop.f32.mrf.mxu0
      %v1183 = vadd.f32 %v1134, %v1182
      %1184 = vmatmul.bf16.gmra.mxu0 %v965
      %v1185 = vpop.f32.mrf.mxu0
      %v1186 = vadd.f32 %v1137, %v1185
      %v1187 = vpop.f32.mrf.mxu0
      %v1188 = vadd.f32 %v1139, %v1187
      %1189 = vmatmul.bf16.gmra.mxu0 %v967
      %v1190 = vpop.f32.mrf.mxu0
      %v1191 = vadd.f32 %v1142, %v1190
      %v1192 = vpop.f32.mrf.mxu0
      %v1193 = vadd.f32 %v1144, %v1192
      %1194 = vmatmul.bf16.gmra.mxu0 %v969
      %v1195 = vpop.f32.mrf.mxu0
      %v1196 = vadd.f32 %v1147, %v1195
      %v1197 = vpop.f32.mrf.mxu0
      %v1198 = vadd.f32 %v1149, %v1197
      %1199 = vdwg.mxu0
      %v1200 = vtanh.pop %v1161
      %v1201 = vtanh.pop %v1163
      %v1202 = vtanh.pop %v1166
      %v1203 = vtanh.pop %v1168
      %v1204 = vtanh.pop %v1171
      %v1205 = vtanh.pop %v1173
      %v1206 = vtanh.pop %v1176
      %v1207 = vtanh.pop %v1178
      %v1208 = vtanh.pop %v1181
      %v1209 = vtanh.pop %v1183
      %v1210 = vtanh.pop %v1186
      %v1211 = vtanh.pop %v1188
      %v1212 = vtanh.pop %v1191
      %v1213 = vtanh.pop %v1193
      %v1214 = vtanh.pop %v1196
      %v1215 = vtanh.pop %v1198
      %v1216 = vmul.f32 %v1200, 2.0
      %v1217 = vmul.f32 %v1201, 2.0
      %v1218 = vmul.f32 %v1202, 2.0
      %v1219 = vmul.f32 %v1203, 2.0
      %v1220 = vmul.f32 %v1204, 2.0
      %v1221 = vmul.f32 %v1205, 2.0
      %v1222 = vmul.f32 %v1206, 2.0
      %v1223 = vmul.f32 %v1207, 2.0
      %v1224 = vmul.f32 %v1208, 2.0
      %v1225 = vmul.f32 %v1209, 2.0
      %v1226 = vmul.f32 %v1210, 2.0
      %v1227 = vmul.f32 %v1211, 2.0
      %v1228 = vmul.f32 %v1212, 2.0
      %v1229 = vmul.f32 %v1213, 2.0
      %v1230 = vmul.f32 %v1214, 2.0
      %v1231 = vmul.f32 %v1215, 2.0
      %1232 = vst [vmem:[%s280] sm:$0xff] %v1216
      %1233 = vst [vmem:[%s280 + $0x8] sm:$0xff] %v1217
      %1234 = vst [vmem:[%s280 + $0x10] sm:$0xff] %v1218
      %1235 = vst [vmem:[%s280 + $0x18] sm:$0xff] %v1219
      %1236 = vst [vmem:[%s280 + $0x20] sm:$0xff] %v1220
      %1237 = vst [vmem:[%s280 + $0x28] sm:$0xff] %v1221
      %1238 = vst [vmem:[%s280 + $0x30] sm:$0xff] %v1222
      %1239 = vst [vmem:[%s280 + $0x38] sm:$0xff] %v1223
      %1240 = vst [vmem:[%s280 + $0x40] sm:$0xff] %v1224
      %1241 = vst [vmem:[%s280 + $0x48] sm:$0xff] %v1225
      %1242 = vst [vmem:[%s280 + $0x50] sm:$0xff] %v1226
      %1243 = vst [vmem:[%s280 + $0x58] sm:$0xff] %v1227
      %1244 = vst [vmem:[%s280 + $0x60] sm:$0xff] %v1228
      %1245 = vst [vmem:[%s280 + $0x68] sm:$0xff] %v1229
      %1246 = vst [vmem:[%s280 + $0x70] sm:$0xff] %v1230
      %1247 = vst [vmem:[%s280 + $0x78] sm:$0xff] %v1231
      %s1248 = smul.u32 16, %s18
      %p1249 = scmp.lt.s32.totalorder %s1248, 31
      %s1250 = scalar_select %p1249, %s1248, 31
      %s1251 = smul.addr %s1250, 8
      %s1252 = scalar_lea.vmem %s7, %s1251
      // Predicated region
      $region49: #{actor_forward.1} parent=47 // pred_check
        %p1253 = pneg %p188
      $region50: #{actor_forward.1} parent=47 // pred_check_branch
        %1255 = sbr.rel (%p1253) target = $region52
      $region51: #{actor_forward.1} parent=47 // pred_region
        %s1256 = smul.u32 16, %s18
      $region52: #{actor_forward.1} parent=47 // pred_fallthru
        _
    $region48: #{actor_forward.1} parent=5 // pred_fallthru
      _
    %p1257 = scmp.le.s32.totalorder 2, %s13
    // Predicated region
    $region53: #{actor_forward.1} parent=5 // pred_check
      %p1258 = pneg %p1257
    $region54: #{actor_forward.1} parent=5 // pred_check_branch
      %1260 = sbr.rel (%p1258) target = $region56
    $region55: #{actor_forward.1} parent=5 // pred_region
      %s1261 = ssub.s32 %s13, 2
      // Predicated region
      $region57: #{actor_forward.1} parent=55 // pred_check
        %p1262 = pneg %p194
      $region58: #{actor_forward.1} parent=55 // pred_check_branch
        %1264 = sbr.rel (%p1262) target = $region60
      $region59: #{actor_forward.1} parent=55 // pred_region
        %s1265 = smul.u32 16, %s19
        %p1266 = scmp.lt.s32.totalorder %s1265, 31
        %s1267 = scalar_select %p1266, %s1265, 31
        %s1268 = smul.addr %s1267, 8
        %s1269 = scalar_lea.vmem %s7, %s1268
      $region60: #{actor_forward.1} parent=55 // pred_fallthru
        _
    $region56: #{actor_forward.1} parent=5 // pred_fallthru
      _
  $region6: #{actor_forward.1} parent=0 // loop_footer
    %s17 = sadd.s32 1, %s13
  $region7: #{actor_forward.1} parent=0 // loop_footer_branch
    %12 = sbr.rel target = $region3
  $region8: #{actor_forward.1} parent=0 // loop_exit
    _

</llo_original>
